<compile_context>
chip_gen: v7x
topology: tpu7x:2x2x1
jax: 0.10.0
libtpu: 0.0.40
codegen_flags: <defaults>
</compile_context>

<pallas_src>
import math

import jax
import jax.numpy as jnp
from jax.experimental import pallas as pl
from jax.experimental.pallas import tpu as pltpu

# "dictionary" sizes / pads (synthetic, deterministic — matches jamo-like vocab)
EMB_SIZE = 32
SIZE_I, SIZE_V, SIZE_F = 20, 22, 29
PAD_I, PAD_V, PAD_F = SIZE_I - 1, SIZE_V - 1, SIZE_F - 1

_VOCAB_PAD = 128  # fused jamo vocab (71) rounded up to one 128-lane band


def _threehot_kernel(idx_ref, w_ref, o_ref):
    """Fused one-hot gather for one tile.

    idx_ref : (R, 3*pack) int32 — indices offset per-table (all < Vpad).
              Column 3*s+t is token-slot s, jamo table t.
    w_ref   : (pack*Vpad, pack*E) pre-scaled block-diagonal fused table.
    o_ref   : (R, pack*E) lane-dense output;
              row r = [emb(tok pack*r) | ... | emb(tok pack*r + pack-1)].
    """
    rows = o_ref.shape[0]
    ncols = idx_ref.shape[1]          # 3 * pack
    pack = ncols // 3
    vpad = w_ref.shape[0] // pack     # 128-lane band width

    # Band-local iota: compares are per 128-lane band instead of the full
    # (R, pack*Vpad) width -> ~4x less VALU work for the one-hot build.
    cols = jax.lax.broadcasted_iota(jnp.int32, (rows, vpad), 1)

    bands = []
    for s in range(pack):
        # The three per-table index ranges are disjoint inside a band, so the
        # sum of the three equality masks is exactly the three-hot vector.
        oh = (idx_ref[:, 3 * s:3 * s + 1] == cols).astype(jnp.float32)
        oh = oh + (idx_ref[:, 3 * s + 1:3 * s + 2] == cols).astype(jnp.float32)
        oh = oh + (idx_ref[:, 3 * s + 2:3 * s + 3] == cols).astype(jnp.float32)
        bands.append(oh)

    # Each band is exactly 128 lanes wide -> lane-dim concat is 128-aligned
    # vreg placement (no cross-lane shuffles).
    onehot = bands[0] if pack == 1 else jnp.concatenate(bands, axis=-1)

    o_ref[...] = jnp.dot(onehot, w_ref[...],
                         preferred_element_type=jnp.float32).astype(o_ref.dtype)


def three_hot_embedding(tokens, w_i, w_v, w_f, *, tile_m=1024):
    """(..., 3) int tokens -> (..., E) embeddings, matching the PyTorch forward.

    Note: out-of-range / negative indices silently contribute a zero row
    (PyTorch nn.Embedding would raise) — acceptable for in-spec inputs.
    """
    assert tokens.ndim > 1 and tokens.shape[-1] == 3, "must be threehot"
    batch_shape = tokens.shape[:-1]
    n = math.prod(batch_shape)
    emb = w_i.shape[1]
    out_dtype = w_i.dtype

    # Lane packing factor: pack tokens so each stored row is 128 lanes wide.
    pack = 128 // emb if (emb < 128 and 128 % emb == 0) else 1

    # --- fused, pre-scaled, block-diagonal table (tiny, built once per call) ---
    scale = math.sqrt(emb) / 3.0
    fused = jnp.concatenate([w_i, w_v, w_f], axis=0).astype(jnp.float32) * scale
    vtot = fused.shape[0]
    vpad = pl.cdiv(vtot, _VOCAB_PAD) * _VOCAB_PAD
    fused = jnp.pad(fused, ((0, vpad - vtot), (0, 0)))               # (Vpad, E)
    # Block-diagonal: (pack*Vpad, pack*E) with `fused` on the diagonal.
    table = jnp.kron(jnp.eye(pack, dtype=jnp.float32), fused)

    # --- index prep: per-table row offsets, pad, pack into (N/pack, 3*pack) ---
    off_tab = jnp.array([0, w_i.shape[0], w_i.shape[0] + w_v.shape[0]], jnp.int32)
    flat = tokens.reshape(n, 3).astype(jnp.int32) + off_tab          # (N, 3)

    step = 8 * pack                                 # tile_m granularity
    tile_m = max(step, (tile_m // step) * step)     # multiple of 8*pack
    tile_m = min(tile_m, pl.cdiv(n, step) * step)   # don't over-pad tiny inputs
    n_pad = pl.cdiv(n, tile_m) * tile_m
    if n_pad != n:
        flat = jnp.pad(flat, ((0, n_pad - n), (0, 0)))  # pad rows gather garbage, sliced off

    idx = flat.reshape(n_pad // pack, 3 * pack)

    rows_per_tile = tile_m // pack

    out = pl.pallas_call(
        _threehot_kernel,
        out_shape=jax.ShapeDtypeStruct((n_pad // pack, pack * emb), out_dtype),
        grid_spec=pltpu.PrefetchScalarGridSpec(
            num_scalar_prefetch=0,
            grid=(n_pad // tile_m,),
            in_specs=[
                pl.BlockSpec((rows_per_tile, 3 * pack), lambda m: (m, 0)),
                pl.BlockSpec((pack * vpad, pack * emb), lambda m: (0, 0)),  # table resident
            ],
            out_specs=pl.BlockSpec((rows_per_tile, pack * emb), lambda m: (m, 0)),
        ),
        compiler_params=pltpu.CompilerParams(
            dimension_semantics=("parallel",)),   # shards across TCs on v7x when grid >= 2
    )(idx, table)

    # (n_pad//pack, pack*E) has identical row-major bytes to (n_pad, E).
    return out.reshape(n_pad, emb)[:n].reshape(*batch_shape, emb)


def _init_params(key):
    """nn.Embedding default init: N(0,1); padding_idx row zeroed."""
    k1, k2, k3 = jax.random.split(key, 3)
    w_i = jax.random.normal(k1, (SIZE_I, EMB_SIZE), jnp.float32).at[PAD_I].set(0.0)
    w_v = jax.random.normal(k2, (SIZE_V, EMB_SIZE), jnp.float32).at[PAD_V].set(0.0)
    w_f = jax.random.normal(k3, (SIZE_F, EMB_SIZE), jnp.float32).at[PAD_F].set(0.0)
    return w_i, w_v, w_f


def _reference(tokens, w_i, w_v, w_f):
    i, v, f = tokens[..., 0], tokens[..., 1], tokens[..., 2]
    out = (jnp.take(w_i, i, axis=0)
           + jnp.take(w_v, v, axis=0)
           + jnp.take(w_f, f, axis=0))
    return out * math.sqrt(EMB_SIZE) / 3.0


if __name__ == "__main__":
    key = jax.random.PRNGKey(0)
    kp, kt1, kt2, kt3 = jax.random.split(key, 4)
    w_i, w_v, w_f = _init_params(kp)

    batch, seq = 2, 8
    tok_i = jax.random.randint(kt1, (batch, seq, 1), 0, SIZE_I, jnp.int32)
    tok_v = jax.random.randint(kt2, (batch, seq, 1), 0, SIZE_V, jnp.int32)
    tok_f = jax.random.randint(kt3, (batch, seq, 1), 0, SIZE_F, jnp.int32)
    tokens = jnp.concatenate([tok_i, tok_v, tok_f], axis=-1)  # (2, 8, 3)

    fwd = jax.jit(lambda t: three_hot_embedding(t, w_i, w_v, w_f))
    out = jax.block_until_ready(fwd(tokens))

    ref = _reference(tokens, w_i, w_v, w_f)
    assert out.shape == (batch, seq, EMB_SIZE)
    assert jnp.allclose(out, ref, atol=1e-5, rtol=1e-5), "mismatch vs reference"

    print("KERNEL_OK")
</pallas_src>

<mosaic_0001>
module attributes {stable_mosaic.version = 11 : i64} {
  func.func @_threehot_kernel(%arg0: i32, %arg1: memref<8x12xi32, #tpu.memory_space<vmem>>, %arg2: memref<512x128xf32, #tpu.memory_space<vmem>>, %arg3: memref<8x128xf32, #tpu.memory_space<vmem>>) attributes {dimension_semantics = [#tpu.dimension_semantics<parallel>], iteration_bounds = array<i64: 1>, scalar_prefetch = 0 : i64, scratch_operands = 0 : i64, tpu.core_type = #tpu.core_type<tc>, window_params = [{transform_indices = @transform_0, window_bounds = array<i64: 8, 12>}, {pipeline_mode = #tpu.pipeline_mode<synchronous>, transform_indices = @transform_1, window_bounds = array<i64: 512, 128>}, {transform_indices = @transform_2, window_bounds = array<i64: 8, 128>}]} {
    %0 = tpu.iota {dimensions = array<i32: 1>} : vector<8x128xi32>
    %c0 = arith.constant 0 : index
    %c0_0 = arith.constant 0 : index
    %1 = vector.load %arg1[%c0, %c0_0] : memref<8x12xi32, #tpu.memory_space<vmem>>, vector<8x1xi32>
    %2 = vector.broadcast %1 : vector<8x1xi32> to vector<8x128xi32>
    %3 = arith.cmpi eq, %2, %0 : vector<8x128xi32>
    %4 = arith.extui %3 : vector<8x128xi1> to vector<8x128xi32>
    %5 = arith.sitofp %4 : vector<8x128xi32> to vector<8x128xf32>
    %c0_1 = arith.constant 0 : index
    %c1 = arith.constant 1 : index
    %6 = vector.load %arg1[%c0_1, %c1] : memref<8x12xi32, #tpu.memory_space<vmem>>, vector<8x1xi32>
    %7 = vector.broadcast %6 : vector<8x1xi32> to vector<8x128xi32>
    %8 = arith.cmpi eq, %7, %0 : vector<8x128xi32>
    %9 = arith.extui %8 : vector<8x128xi1> to vector<8x128xi32>
    %10 = arith.sitofp %9 : vector<8x128xi32> to vector<8x128xf32>
    %11 = arith.addf %5, %10 : vector<8x128xf32>
    %c0_2 = arith.constant 0 : index
    %c2 = arith.constant 2 : index
    %12 = vector.load %arg1[%c0_2, %c2] : memref<8x12xi32, #tpu.memory_space<vmem>>, vector<8x1xi32>
    %13 = vector.broadcast %12 : vector<8x1xi32> to vector<8x128xi32>
    %14 = arith.cmpi eq, %13, %0 : vector<8x128xi32>
    %15 = arith.extui %14 : vector<8x128xi1> to vector<8x128xi32>
    %16 = arith.sitofp %15 : vector<8x128xi32> to vector<8x128xf32>
    %17 = arith.addf %11, %16 : vector<8x128xf32>
    %c0_3 = arith.constant 0 : index
    %c3 = arith.constant 3 : index
    %18 = vector.load %arg1[%c0_3, %c3] : memref<8x12xi32, #tpu.memory_space<vmem>>, vector<8x1xi32>
    %19 = vector.broadcast %18 : vector<8x1xi32> to vector<8x128xi32>
    %20 = arith.cmpi eq, %19, %0 : vector<8x128xi32>
    %21 = arith.extui %20 : vector<8x128xi1> to vector<8x128xi32>
    %22 = arith.sitofp %21 : vector<8x128xi32> to vector<8x128xf32>
    %c0_4 = arith.constant 0 : index
    %c4 = arith.constant 4 : index
    %23 = vector.load %arg1[%c0_4, %c4] : memref<8x12xi32, #tpu.memory_space<vmem>>, vector<8x1xi32>
    %24 = vector.broadcast %23 : vector<8x1xi32> to vector<8x128xi32>
    %25 = arith.cmpi eq, %24, %0 : vector<8x128xi32>
    %26 = arith.extui %25 : vector<8x128xi1> to vector<8x128xi32>
    %27 = arith.sitofp %26 : vector<8x128xi32> to vector<8x128xf32>
    %28 = arith.addf %22, %27 : vector<8x128xf32>
    %c0_5 = arith.constant 0 : index
    %c5 = arith.constant 5 : index
    %29 = vector.load %arg1[%c0_5, %c5] : memref<8x12xi32, #tpu.memory_space<vmem>>, vector<8x1xi32>
    %30 = vector.broadcast %29 : vector<8x1xi32> to vector<8x128xi32>
    %31 = arith.cmpi eq, %30, %0 : vector<8x128xi32>
    %32 = arith.extui %31 : vector<8x128xi1> to vector<8x128xi32>
    %33 = arith.sitofp %32 : vector<8x128xi32> to vector<8x128xf32>
    %34 = arith.addf %28, %33 : vector<8x128xf32>
    %c0_6 = arith.constant 0 : index
    %c6 = arith.constant 6 : index
    %35 = vector.load %arg1[%c0_6, %c6] : memref<8x12xi32, #tpu.memory_space<vmem>>, vector<8x1xi32>
    %36 = vector.broadcast %35 : vector<8x1xi32> to vector<8x128xi32>
    %37 = arith.cmpi eq, %36, %0 : vector<8x128xi32>
    %38 = arith.extui %37 : vector<8x128xi1> to vector<8x128xi32>
    %39 = arith.sitofp %38 : vector<8x128xi32> to vector<8x128xf32>
    %c0_7 = arith.constant 0 : index
    %c7 = arith.constant 7 : index
    %40 = vector.load %arg1[%c0_7, %c7] : memref<8x12xi32, #tpu.memory_space<vmem>>, vector<8x1xi32>
    %41 = vector.broadcast %40 : vector<8x1xi32> to vector<8x128xi32>
    %42 = arith.cmpi eq, %41, %0 : vector<8x128xi32>
    %43 = arith.extui %42 : vector<8x128xi1> to vector<8x128xi32>
    %44 = arith.sitofp %43 : vector<8x128xi32> to vector<8x128xf32>
    %45 = arith.addf %39, %44 : vector<8x128xf32>
    %c0_8 = arith.constant 0 : index
    %c8 = arith.constant 8 : index
    %46 = vector.load %arg1[%c0_8, %c8] : memref<8x12xi32, #tpu.memory_space<vmem>>, vector<8x1xi32>
    %47 = vector.broadcast %46 : vector<8x1xi32> to vector<8x128xi32>
    %48 = arith.cmpi eq, %47, %0 : vector<8x128xi32>
    %49 = arith.extui %48 : vector<8x128xi1> to vector<8x128xi32>
    %50 = arith.sitofp %49 : vector<8x128xi32> to vector<8x128xf32>
    %51 = arith.addf %45, %50 : vector<8x128xf32>
    %c0_9 = arith.constant 0 : index
    %c9 = arith.constant 9 : index
    %52 = vector.load %arg1[%c0_9, %c9] : memref<8x12xi32, #tpu.memory_space<vmem>>, vector<8x1xi32>
    %53 = vector.broadcast %52 : vector<8x1xi32> to vector<8x128xi32>
    %54 = arith.cmpi eq, %53, %0 : vector<8x128xi32>
    %55 = arith.extui %54 : vector<8x128xi1> to vector<8x128xi32>
    %56 = arith.sitofp %55 : vector<8x128xi32> to vector<8x128xf32>
    %c0_10 = arith.constant 0 : index
    %c10 = arith.constant 10 : index
    %57 = vector.load %arg1[%c0_10, %c10] : memref<8x12xi32, #tpu.memory_space<vmem>>, vector<8x1xi32>
    %58 = vector.broadcast %57 : vector<8x1xi32> to vector<8x128xi32>
    %59 = arith.cmpi eq, %58, %0 : vector<8x128xi32>
    %60 = arith.extui %59 : vector<8x128xi1> to vector<8x128xi32>
    %61 = arith.sitofp %60 : vector<8x128xi32> to vector<8x128xf32>
    %62 = arith.addf %56, %61 : vector<8x128xf32>
    %c0_11 = arith.constant 0 : index
    %c11 = arith.constant 11 : index
    %63 = vector.load %arg1[%c0_11, %c11] : memref<8x12xi32, #tpu.memory_space<vmem>>, vector<8x1xi32>
    %64 = vector.broadcast %63 : vector<8x1xi32> to vector<8x128xi32>
    %65 = arith.cmpi eq, %64, %0 : vector<8x128xi32>
    %66 = arith.extui %65 : vector<8x128xi1> to vector<8x128xi32>
    %67 = arith.sitofp %66 : vector<8x128xi32> to vector<8x128xf32>
    %68 = arith.addf %62, %67 : vector<8x128xf32>
    %69 = tpu.concatenate %17, %34, %51, %68 in 1 : vector<8x128xf32>, vector<8x128xf32>, vector<8x128xf32>, vector<8x128xf32> -> vector<8x512xf32>
    %c0_12 = arith.constant 0 : index
    %c0_13 = arith.constant 0 : index
    %70 = vector.load %arg2[%c0_12, %c0_13] : memref<512x128xf32, #tpu.memory_space<vmem>>, vector<512x128xf32>
    %cst = arith.constant dense<0.000000e+00> : vector<8x128xf32>
    %71 = tpu.matmul %69, %70, %cst {dimension_numbers = #tpu.dot_dimension_numbers<[1], [0], [0], [1], [0, 0, 1, 1], [], []>} : vector<8x512xf32>, vector<512x128xf32>, vector<8x128xf32> -> vector<8x128xf32>
    %c0_14 = arith.constant 0 : index
    %c0_15 = arith.constant 0 : index
    %72 = vector.load %arg3[%c0_14, %c0_15] : memref<8x128xf32, #tpu.memory_space<vmem>>, vector<8x128xf32>
    tpu.vector_store %arg3[%c0_14, %c0_15], %71 {strides = array<i32>} : memref<8x128xf32, #tpu.memory_space<vmem>>, vector<8x128xf32>,
    return
  }
  func.func @transform_0(%arg0: i32) -> (i32, i32) {
    %c0_i32 = arith.constant 0 : i32
    %c0_i32_0 = arith.constant 0 : i32
    return %arg0, %c0_i32 : i32, i32
  }
  func.func @transform_1(%arg0: i32) -> (i32, i32) {
    %c0_i32 = arith.constant 0 : i32
    %c0_i32_0 = arith.constant 0 : i32
    %c0_i32_1 = arith.constant 0 : i32
    return %c0_i32, %c0_i32_0 : i32, i32
  }
  func.func @transform_2(%arg0: i32) -> (i32, i32) {
    %c0_i32 = arith.constant 0 : i32
    %c0_i32_0 = arith.constant 0 : i32
    return %arg0, %c0_i32 : i32, i32
  }
}

</mosaic_0001>

<llo_original>
// kernel: _lambda_.1
$region0: #{_lambda_.1}
  #allocation0 [shape = 'u32[]', space=smem, size = 0x4, offset = 0x4, fixed_abs, tag = 'smem constant byte address 0x4 - core index']
  #allocation1 [shape = 'u32[144,128]{1,0:T(1,128)}', space=vmem, size = 0x12000, scoped, tag = 'internal scratch']
  %s0 = inlined_call_operand.vmem [shape: s32[8,12], index: 0, kind: input, shape index: {}]
  %s1 = inlined_call_operand.vmem [shape: f32[512,128], index: 1, kind: input, shape index: {}]
  %s2 = inlined_call_operand.vmem [shape: f32[8,128], index: 2, kind: output, shape index: {}]
  %s3 = sld [smem:[#allocation0]]
  $region18: #{_lambda_.1} parent=0
    _
  %s5 = ssub.s32 1, %s3
  %s6 = scalar_select 0, %s5, %s3
  // Predicated region
  $region2: #{_lambda_.1} parent=0 // pred_check
    _
  $region3: #{_lambda_.1} parent=0 // pred_check_branch
    %8 = sbr.rel (0) target = $region5
  $region4: #{_lambda_.1} parent=0 // pred_region
    _
  $region5: #{_lambda_.1} parent=0 // pred_fallthru
    _
  // Predicated region
  $region6: #{_lambda_.1} parent=0 // pred_check
    _
  $region7: #{_lambda_.1} parent=0 // pred_check_branch
    %10 = sbr.rel (0) target = $region9
  $region8: #{_lambda_.1} parent=0 // pred_region
    _
  $region9: #{_lambda_.1} parent=0 // pred_fallthru
    _
  %v11 = vlaneseq
  %v12 = vand.u32 %v11, 127
  %v13 = vld [vmem:[%s0] sm:$0xff]
  %14 = vset.pattern.permute.xlu0 0
  %15 = vperm.xlu0 %14, %v13
  %v16 = vpop.permute.xlu0 %15
  %vm17 = vcmp.eq.s32.totalorder %v16, %v12
  %v18 = vsel %vm17, 1, 0
  %v19 = vcvt.s32.f32 %v18
  %20 = vset.pattern.permute.xlu0 1
  %21 = vperm.xlu0 %20, %v13
  %v22 = vpop.permute.xlu0 %21
  %vm23 = vcmp.eq.s32.totalorder %v22, %v12
  %v24 = vsel %vm23, 1, 0
  %v25 = vcvt.s32.f32 %v24
  %v26 = vadd.f32 %v19, %v25
  %27 = vset.pattern.permute.xlu0 2
  %28 = vperm.xlu0 %27, %v13
  %v29 = vpop.permute.xlu0 %28
  %vm30 = vcmp.eq.s32.totalorder %v29, %v12
  %v31 = vsel %vm30, 1, 0
  %v32 = vcvt.s32.f32 %v31
  %v33 = vadd.f32 %v26, %v32
  %34 = vset.pattern.permute.xlu0 3
  %35 = vperm.xlu0 %34, %v13
  %v36 = vpop.permute.xlu0 %35
  %vm37 = vcmp.eq.s32.totalorder %v36, %v12
  %v38 = vsel %vm37, 1, 0
  %v39 = vcvt.s32.f32 %v38
  %40 = vset.pattern.permute.xlu0 4
  %41 = vperm.xlu0 %40, %v13
  %v42 = vpop.permute.xlu0 %41
  %vm43 = vcmp.eq.s32.totalorder %v42, %v12
  %v44 = vsel %vm43, 1, 0
  %v45 = vcvt.s32.f32 %v44
  %v46 = vadd.f32 %v39, %v45
  %47 = vset.pattern.permute.xlu0 5
  %48 = vperm.xlu0 %47, %v13
  %v49 = vpop.permute.xlu0 %48
  %vm50 = vcmp.eq.s32.totalorder %v49, %v12
  %v51 = vsel %vm50, 1, 0
  %v52 = vcvt.s32.f32 %v51
  %v53 = vadd.f32 %v46, %v52
  %54 = vset.pattern.permute.xlu0 6
  %55 = vperm.xlu0 %54, %v13
  %v56 = vpop.permute.xlu0 %55
  %vm57 = vcmp.eq.s32.totalorder %v56, %v12
  %v58 = vsel %vm57, 1, 0
  %v59 = vcvt.s32.f32 %v58
  %60 = vset.pattern.permute.xlu0 7
  %61 = vperm.xlu0 %60, %v13
  %v62 = vpop.permute.xlu0 %61
  %vm63 = vcmp.eq.s32.totalorder %v62, %v12
  %v64 = vsel %vm63, 1, 0
  %v65 = vcvt.s32.f32 %v64
  %v66 = vadd.f32 %v59, %v65
  %67 = vset.pattern.permute.xlu0 8
  %68 = vperm.xlu0 %67, %v13
  %v69 = vpop.permute.xlu0 %68
  %vm70 = vcmp.eq.s32.totalorder %v69, %v12
  %v71 = vsel %vm70, 1, 0
  %v72 = vcvt.s32.f32 %v71
  %v73 = vadd.f32 %v66, %v72
  %74 = vset.pattern.permute.xlu0 9
  %75 = vperm.xlu0 %74, %v13
  %v76 = vpop.permute.xlu0 %75
  %vm77 = vcmp.eq.s32.totalorder %v76, %v12
  %v78 = vsel %vm77, 1, 0
  %v79 = vcvt.s32.f32 %v78
  %80 = vset.pattern.permute.xlu0 10
  %81 = vperm.xlu0 %80, %v13
  %v82 = vpop.permute.xlu0 %81
  %vm83 = vcmp.eq.s32.totalorder %v82, %v12
  %v84 = vsel %vm83, 1, 0
  %v85 = vcvt.s32.f32 %v84
  %v86 = vadd.f32 %v79, %v85
  %87 = vset.pattern.permute.xlu0 11
  %88 = vperm.xlu0 %87, %v13
  %v89 = vpop.permute.xlu0 %88
  %vm90 = vcmp.eq.s32.totalorder %v89, %v12
  %v91 = vsel %vm90, 1, 0
  %v92 = vcvt.s32.f32 %v91
  %v93 = vadd.f32 %v86, %v92
  %v94 = vld [vmem:[%s1] sm:$0xff]
  %v95 = vld [vmem:[%s1 + $0x8] sm:$0xff]
  %v96 = vld [vmem:[%s1 + $0x10] sm:$0xff]
  %v97 = vld [vmem:[%s1 + $0x18] sm:$0xff]
  %v98 = vld [vmem:[%s1 + $0x20] sm:$0xff]
  %v99 = vld [vmem:[%s1 + $0x28] sm:$0xff]
  %v100 = vld [vmem:[%s1 + $0x30] sm:$0xff]
  %v101 = vld [vmem:[%s1 + $0x38] sm:$0xff]
  %v102 = vld [vmem:[%s1 + $0x40] sm:$0xff]
  %v103 = vld [vmem:[%s1 + $0x48] sm:$0xff]
  %v104 = vld [vmem:[%s1 + $0x50] sm:$0xff]
  %v105 = vld [vmem:[%s1 + $0x58] sm:$0xff]
  %v106 = vld [vmem:[%s1 + $0x60] sm:$0xff]
  %v107 = vld [vmem:[%s1 + $0x68] sm:$0xff]
  %v108 = vld [vmem:[%s1 + $0x70] sm:$0xff]
  %v109 = vld [vmem:[%s1 + $0x78] sm:$0xff]
  %v110 = vld [vmem:[%s1 + $0x80] sm:$0xff]
  %v111 = vld [vmem:[%s1 + $0x88] sm:$0xff]
  %v112 = vld [vmem:[%s1 + $0x90] sm:$0xff]
  %v113 = vld [vmem:[%s1 + $0x98] sm:$0xff]
  %v114 = vld [vmem:[%s1 + $0xa0] sm:$0xff]
  %v115 = vld [vmem:[%s1 + $0xa8] sm:$0xff]
  %v116 = vld [vmem:[%s1 + $0xb0] sm:$0xff]
  %v117 = vld [vmem:[%s1 + $0xb8] sm:$0xff]
  %v118 = vld [vmem:[%s1 + $0xc0] sm:$0xff]
  %v119 = vld [vmem:[%s1 + $0xc8] sm:$0xff]
  %v120 = vld [vmem:[%s1 + $0xd0] sm:$0xff]
  %v121 = vld [vmem:[%s1 + $0xd8] sm:$0xff]
  %v122 = vld [vmem:[%s1 + $0xe0] sm:$0xff]
  %v123 = vld [vmem:[%s1 + $0xe8] sm:$0xff]
  %v124 = vld [vmem:[%s1 + $0xf0] sm:$0xff]
  %v125 = vld [vmem:[%s1 + $0xf8] sm:$0xff]
  %v126 = vld [vmem:[%s1 + $0x100] sm:$0xff]
  %v127 = vld [vmem:[%s1 + $0x108] sm:$0xff]
  %v128 = vld [vmem:[%s1 + $0x110] sm:$0xff]
  %v129 = vld [vmem:[%s1 + $0x118] sm:$0xff]
  %v130 = vld [vmem:[%s1 + $0x120] sm:$0xff]
  %v131 = vld [vmem:[%s1 + $0x128] sm:$0xff]
  %v132 = vld [vmem:[%s1 + $0x130] sm:$0xff]
  %v133 = vld [vmem:[%s1 + $0x138] sm:$0xff]
  %v134 = vld [vmem:[%s1 + $0x140] sm:$0xff]
  %v135 = vld [vmem:[%s1 + $0x148] sm:$0xff]
  %v136 = vld [vmem:[%s1 + $0x150] sm:$0xff]
  %v137 = vld [vmem:[%s1 + $0x158] sm:$0xff]
  %v138 = vld [vmem:[%s1 + $0x160] sm:$0xff]
  %v139 = vld [vmem:[%s1 + $0x168] sm:$0xff]
  %v140 = vld [vmem:[%s1 + $0x170] sm:$0xff]
  %v141 = vld [vmem:[%s1 + $0x178] sm:$0xff]
  %v142 = vld [vmem:[%s1 + $0x180] sm:$0xff]
  %v143 = vld [vmem:[%s1 + $0x188] sm:$0xff]
  %v144 = vld [vmem:[%s1 + $0x190] sm:$0xff]
  %v145 = vld [vmem:[%s1 + $0x198] sm:$0xff]
  %v146 = vld [vmem:[%s1 + $0x1a0] sm:$0xff]
  %v147 = vld [vmem:[%s1 + $0x1a8] sm:$0xff]
  %v148 = vld [vmem:[%s1 + $0x1b0] sm:$0xff]
  %v149 = vld [vmem:[%s1 + $0x1b8] sm:$0xff]
  %v150 = vld [vmem:[%s1 + $0x1c0] sm:$0xff]
  %v151 = vld [vmem:[%s1 + $0x1c8] sm:$0xff]
  %v152 = vld [vmem:[%s1 + $0x1d0] sm:$0xff]
  %v153 = vld [vmem:[%s1 + $0x1d8] sm:$0xff]
  %v154 = vld [vmem:[%s1 + $0x1e0] sm:$0xff]
  %v155 = vld [vmem:[%s1 + $0x1e8] sm:$0xff]
  %v156 = vld [vmem:[%s1 + $0x1f0] sm:$0xff]
  %v157 = vld [vmem:[%s1 + $0x1f8] sm:$0xff]
  %158 = vmatprep.subr.mxu0 0.0
  %159 = vmatpush1.msra.mxu0 %v94
  %160 = vmatprep.subr.mxu0 0.0
  %161 = vmatpush1.msra.mxu0 %v95
  %162 = vmatprep.subr.mxu0 0.0
  %163 = vmatpush1.msra.mxu0 %v96
  %164 = vmatprep.subr.mxu0 0.0
  %165 = vmatpush1.msra.mxu0 %v97
  %166 = vmatprep.subr.mxu0 0.0
  %167 = vmatpush1.msra.mxu0 %v98
  %168 = vmatprep.subr.mxu0 0.0
  %169 = vmatpush1.msra.mxu0 %v99
  %170 = vmatprep.subr.mxu0 0.0
  %171 = vmatpush1.msra.mxu0 %v100
  %172 = vmatprep.subr.mxu0 0.0
  %173 = vmatpush1.msra.mxu0 %v101
  %174 = vmatprep.subr.mxu0 0.0
  %175 = vmatpush1.msra.mxu0 %v102
  %176 = vmatprep.subr.mxu0 0.0
  %177 = vmatpush1.msra.mxu0 %v103
  %178 = vmatprep.subr.mxu0 0.0
  %179 = vmatpush1.msra.mxu0 %v104
  %180 = vmatprep.subr.mxu0 0.0
  %181 = vmatpush1.msra.mxu0 %v105
  %182 = vmatprep.subr.mxu0 0.0
  %183 = vmatpush1.msra.mxu0 %v106
  %184 = vmatprep.subr.mxu0 0.0
  %185 = vmatpush1.msra.mxu0 %v107
  %186 = vmatprep.subr.mxu0 0.0
  %187 = vmatpush1.msra.mxu0 %v108
  %188 = vmatprep.subr.mxu0 0.0
  %189 = vmatpush1.msra.mxu0 %v109
  %190 = vmatprep.subr.mxu0 0.0
  %191 = vmatpush1.msra.mxu0 %v110
  %192 = vmatprep.subr.mxu0 0.0
  %193 = vmatpush1.msra.mxu0 %v111
  %194 = vmatprep.subr.mxu0 0.0
  %195 = vmatpush1.msra.mxu0 %v112
  %196 = vmatprep.subr.mxu0 0.0
  %197 = vmatpush1.msra.mxu0 %v113
  %198 = vmatprep.subr.mxu0 0.0
  %199 = vmatpush1.msra.mxu0 %v114
  %200 = vmatprep.subr.mxu0 0.0
  %201 = vmatpush1.msra.mxu0 %v115
  %202 = vmatprep.subr.mxu0 0.0
  %203 = vmatpush1.msra.mxu0 %v116
  %204 = vmatprep.subr.mxu0 0.0
  %205 = vmatpush1.msra.mxu0 %v117
  %206 = vmatprep.subr.mxu0 0.0
  %207 = vmatpush1.msra.mxu0 %v118
  %208 = vmatprep.subr.mxu0 0.0
  %209 = vmatpush1.msra.mxu0 %v119
  %210 = vmatprep.subr.mxu0 0.0
  %211 = vmatpush1.msra.mxu0 %v120
  %212 = vmatprep.subr.mxu0 0.0
  %213 = vmatpush1.msra.mxu0 %v121
  %214 = vmatprep.subr.mxu0 0.0
  %215 = vmatpush1.msra.mxu0 %v122
  %216 = vmatprep.subr.mxu0 0.0
  %217 = vmatpush1.msra.mxu0 %v123
  %218 = vmatprep.subr.mxu0 0.0
  %219 = vmatpush1.msra.mxu0 %v124
  %220 = vmatprep.subr.mxu0 0.0
  %221 = vmatpush1.msra.mxu0 %v125
  %222 = vmatprep.mubr.f32.mxu0 %v53
  %223 = vmatmul.mubr.f32.gmra.mrb[0].mxu0 %v33
  %v224 = vpop.f32.mrb[0].mxu0
  %v225 = vadd.f32 0.0, %v224
  %v226 = vpop.f32.mrb[0].mxu0
  %227 = vdwg.mxu0
  %228 = vmatprep.subr.mxu0 0.0
  %229 = vmatpush1.msra.mxu0 %v126
  %230 = vmatprep.subr.mxu0 0.0
  %231 = vmatpush1.msra.mxu0 %v127
  %232 = vmatprep.subr.mxu0 0.0
  %233 = vmatpush1.msra.mxu0 %v128
  %234 = vmatprep.subr.mxu0 0.0
  %235 = vmatpush1.msra.mxu0 %v129
  %236 = vmatprep.subr.mxu0 0.0
  %237 = vmatpush1.msra.mxu0 %v130
  %238 = vmatprep.subr.mxu0 0.0
  %239 = vmatpush1.msra.mxu0 %v131
  %240 = vmatprep.subr.mxu0 0.0
  %241 = vmatpush1.msra.mxu0 %v132
  %242 = vmatprep.subr.mxu0 0.0
  %243 = vmatpush1.msra.mxu0 %v133
  %244 = vmatprep.subr.mxu0 0.0
  %245 = vmatpush1.msra.mxu0 %v134
  %246 = vmatprep.subr.mxu0 0.0
  %247 = vmatpush1.msra.mxu0 %v135
  %248 = vmatprep.subr.mxu0 0.0
  %249 = vmatpush1.msra.mxu0 %v136
  %250 = vmatprep.subr.mxu0 0.0
  %251 = vmatpush1.msra.mxu0 %v137
  %252 = vmatprep.subr.mxu0 0.0
  %253 = vmatpush1.msra.mxu0 %v138
  %254 = vmatprep.subr.mxu0 0.0
  %255 = vmatpush1.msra.mxu0 %v139
  %256 = vmatprep.subr.mxu0 0.0
  %257 = vmatpush1.msra.mxu0 %v140
  %258 = vmatprep.subr.mxu0 0.0
  %259 = vmatpush1.msra.mxu0 %v141
  %260 = vmatprep.subr.mxu0 0.0
  %261 = vmatpush1.msra.mxu0 %v142
  %262 = vmatprep.subr.mxu0 0.0
  %263 = vmatpush1.msra.mxu0 %v143
  %264 = vmatprep.subr.mxu0 0.0
  %265 = vmatpush1.msra.mxu0 %v144
  %266 = vmatprep.subr.mxu0 0.0
  %267 = vmatpush1.msra.mxu0 %v145
  %268 = vmatprep.subr.mxu0 0.0
  %269 = vmatpush1.msra.mxu0 %v146
  %270 = vmatprep.subr.mxu0 0.0
  %271 = vmatpush1.msra.mxu0 %v147
  %272 = vmatprep.subr.mxu0 0.0
  %273 = vmatpush1.msra.mxu0 %v148
  %274 = vmatprep.subr.mxu0 0.0
  %275 = vmatpush1.msra.mxu0 %v149
  %276 = vmatprep.subr.mxu0 0.0
  %277 = vmatpush1.msra.mxu0 %v150
  %278 = vmatprep.subr.mxu0 0.0
  %279 = vmatpush1.msra.mxu0 %v151
  %280 = vmatprep.subr.mxu0 0.0
  %281 = vmatpush1.msra.mxu0 %v152
  %282 = vmatprep.subr.mxu0 0.0
  %283 = vmatpush1.msra.mxu0 %v153
  %284 = vmatprep.subr.mxu0 0.0
  %285 = vmatpush1.msra.mxu0 %v154
  %286 = vmatprep.subr.mxu0 0.0
  %287 = vmatpush1.msra.mxu0 %v155
  %288 = vmatprep.subr.mxu0 0.0
  %289 = vmatpush1.msra.mxu0 %v156
  %290 = vmatprep.subr.mxu0 0.0
  %291 = vmatpush1.msra.mxu0 %v157
  %292 = vmatprep.mubr.f32.mxu0 %v93
  %293 = vmatmul.mubr.f32.gmra.mrb[0].mxu0 %v73
  %v294 = vpop.f32.mrb[0].mxu0
  %v295 = vadd.f32 %v225, %v294
  %v296 = vpop.f32.mrb[0].mxu0
  %297 = vdwg.mxu0
  %298 = vst [vmem:[%s2] sm:$0xff] %v295
  // Predicated region
  $region10: #{_lambda_.1} parent=0 // pred_check
    _
  $region11: #{_lambda_.1} parent=0 // pred_check_branch
    %300 = sbr.rel (0) target = $region13
  $region12: #{_lambda_.1} parent=0 // pred_region
    _
  $region13: #{_lambda_.1} parent=0 // pred_fallthru
    _
  // Predicated region
  $region14: #{_lambda_.1} parent=0 // pred_check
    _
  $region15: #{_lambda_.1} parent=0 // pred_check_branch
    %302 = sbr.rel (0) target = $region17
  $region16: #{_lambda_.1} parent=0 // pred_region
    _
  $region17: #{_lambda_.1} parent=0 // pred_fallthru
    _

</llo_original>
